<compile_context>
chip_gen: v7x
topology: tpu7x:2x2x1
jax: 0.10.0
libtpu: 0.0.40
codegen_flags: <defaults>
</compile_context>

<pallas_src>
import math

import jax
import jax.numpy as jnp
from jax.experimental import pallas as pl
from jax.experimental.pallas import tpu as pltpu


# Shared compiler params: parallel batch axis (megacore on v7x), explicit scoped
# VMEM limit that is safe on every generation (v5e/v6e: 128 MiB phys, v7x: 64 MiB).
_COMPILER_PARAMS = pltpu.CompilerParams(
    dimension_semantics=("parallel",),
    vmem_limit_bytes=32 * 1024 * 1024,
)


def _pick_batch_tile(batch, requested=None, max_tile=512):
    """Choose a batch tile: multiple of 8 sublanes (or the full batch), divides B."""
    if requested is not None:
        tb = min(requested, batch)
        if batch % tb != 0 or (tb != batch and tb % 8 != 0):
            raise ValueError(f"batch_tile={requested} incompatible with batch={batch}")
        return tb
    if batch <= max_tile:
        return batch
    tb = max_tile
    while tb >= 8:
        if batch % tb == 0:
            return tb
        tb //= 2
    return batch  # fallback: single tile


# ---------------------------------------------------------------------------
# Path 1: input_dims is an int  ->  four nn.Linear layers (r, i, j, k), fused.
# ---------------------------------------------------------------------------
def _qlinear_fused_kernel(x_ref, w_ref, b_ref, o_ref):
    # x_ref: (TB, In), w_ref: (In, 4*Out) bf16, b_ref: (1, 4*Out) f32,
    # o_ref: (TB, 4*Out) f32 (lane-dense: 4*Out is a multiple of 128).
    x = x_ref[...].astype(w_ref.dtype)            # bf16 MXU inputs (cast hidden in-kernel)
    y = jnp.dot(x, w_ref[...], preferred_element_type=jnp.float32)
    o_ref[...] = (y + b_ref[...]).astype(o_ref.dtype)   # f32 bias add on the VPU


def init_quaternion_linear_params(w, b, compute_dtype=jnp.bfloat16):
    """w: (4, In, Out), b: (4, Out). Fused ONCE at init -> no per-call transposes."""
    q, in_dim, out_dim = w.shape
    # w_fused[in, q*Out + o] = w[q, in, o];  b_fused[0, q*Out + o] = b[q, o]
    w_fused = jnp.transpose(w, (1, 0, 2)).reshape(in_dim, q * out_dim).astype(compute_dtype)
    b_fused = b.reshape(1, q * out_dim).astype(jnp.float32)
    return {"w_fused": w_fused, "b_fused": b_fused, "out_dim": out_dim}


def quaternion_linear_fwd(params, x, batch_tile=None):
    """x: (B, In) -> (B, 4, Out); components (r, i, j, k) along axis 1."""
    w_fused, b_fused, out_dim = params["w_fused"], params["b_fused"], params["out_dim"]
    bsz, in_dim = x.shape
    qout = w_fused.shape[1]
    tb = _pick_batch_tile(bsz, batch_tile)
    out = pl.pallas_call(
        _qlinear_fused_kernel,
        out_shape=jax.ShapeDtypeStruct((bsz, qout), jnp.float32),
        grid=(bsz // tb,),
        in_specs=[
            pl.BlockSpec((tb, in_dim), lambda i: (i, 0)),     # batch-tiled activations
            pl.BlockSpec((in_dim, qout), lambda i: (0, 0)),   # weights VMEM-resident
            pl.BlockSpec((1, qout), lambda i: (0, 0)),        # bias VMEM-resident
        ],
        out_specs=pl.BlockSpec((tb, qout), lambda i: (i, 0)), # lane-dense stores
        compiler_params=_COMPILER_PARAMS,
    )(x, w_fused, b_fused)
    return out.reshape(bsz, qout // out_dim, out_dim)


# ---------------------------------------------------------------------------
# Path 2: input_dims is a list -> four IntegerEncoders (combine='sum'), fused.
# One multi-hot @ fused-table matmul = per-feature lookup + sum over features
# + all 4 quaternion components in a single MXU pass per batch tile.
# NOTE: out-of-range / negative ids produce an all-zero multi-hot row (silent
# zero embedding); padded vocab rows must be zeroed in the table (done at init).
# ---------------------------------------------------------------------------
def _qembed_fused_kernel(idx_ref, tab_ref, o_ref):
    # idx_ref: (TB, F) int32 raw ids, tab_ref: (F*V, 4*D) bf16, o_ref: (TB, 4*D) f32.
    tb, f_dim = idx_ref.shape
    fv = tab_ref.shape[0]
    v = fv // f_dim
    # Offset feature f's ids into rows [f*V, (f+1)*V) of the fused table (in-kernel,
    # so the wrapper adds no extra XLA pass over x).
    idx = idx_ref[...] + jax.lax.broadcasted_iota(jnp.int32, (tb, f_dim), 1) * v
    col = jax.lax.broadcasted_iota(jnp.int32, (tb, fv), 1)
    # Multi-hot: OR the F disjoint boolean masks, single cast at the end
    # (no zeros init, no per-feature casts/adds).
    hot = col == idx[:, 0:1]
    for f in range(1, f_dim):                      # F is a small static Python int
        hot = jnp.logical_or(hot, col == idx[:, f:f + 1])
    o_ref[...] = jnp.dot(hot.astype(tab_ref.dtype), tab_ref[...],
                         preferred_element_type=jnp.float32).astype(o_ref.dtype)


def init_quaternion_integer_params(tables, compute_dtype=jnp.bfloat16):
    """tables: (4, F, V, Out) with padded vocab rows zeroed. Fused ONCE at init."""
    q, f_dim, v, out_dim = tables.shape
    # tab_fused[f*V + v, q*Out + d] = tables[q, f, v, d]
    tab_fused = (jnp.transpose(tables, (1, 2, 0, 3))
                 .reshape(f_dim * v, q * out_dim).astype(compute_dtype))
    return {"tab_fused": tab_fused, "out_dim": out_dim,
            "num_features": f_dim, "vocab": v}


def quaternion_integer_fwd(params, x_int, batch_tile=None):
    """x_int: (B, F) or (B,) int -> (B, 4, Out); per-feature embeddings summed."""
    tab_fused, out_dim = params["tab_fused"], params["out_dim"]
    if x_int.ndim == 1:
        x_int = x_int[:, None]
    bsz, f_dim = x_int.shape
    fv, qd = tab_fused.shape
    tb = _pick_batch_tile(bsz, batch_tile)
    out = pl.pallas_call(
        _qembed_fused_kernel,
        out_shape=jax.ShapeDtypeStruct((bsz, qd), jnp.float32),
        grid=(bsz // tb,),
        in_specs=[
            pl.BlockSpec((tb, f_dim), lambda i: (i, 0)),      # batch-tiled ids
            pl.BlockSpec((fv, qd), lambda i: (0, 0)),         # table VMEM-resident
        ],
        out_specs=pl.BlockSpec((tb, qd), lambda i: (i, 0)),   # lane-dense stores
        compiler_params=_COMPILER_PARAMS,
    )(x_int.astype(jnp.int32), tab_fused)
    return out.reshape(bsz, qd // out_dim, out_dim)


# ---------------------------------------------------------------------------
if __name__ == "__main__":
    key = jax.random.PRNGKey(0)
    k_x, k_w, k_b, k_rest = jax.random.split(key, 4)

    # ----- QuaternionEncoder(out_dim=32, input_dims=32)  [Linear path] -----
    B, In, Out = 256, 32, 32
    x = jax.random.normal(k_x, (B, In), jnp.float32)
    bound = 1.0 / math.sqrt(In)                       # torch Linear default-ish init
    w = jax.random.uniform(k_w, (4, In, Out), jnp.float32, -bound, bound)
    b = jax.random.uniform(k_b, (4, Out), jnp.float32, -bound, bound)

    lin_params = init_quaternion_linear_params(w, b)            # fused once at init
    out_lin = quaternion_linear_fwd(lin_params, x, batch_tile=128)   # grid=(2,), parallel
    jax.block_until_ready(out_lin)

    # Reference on the same bf16-quantized operands the kernel consumes (f32 accumulate).
    x_q = x.astype(jnp.bfloat16).astype(jnp.float32)
    w_q = w.astype(jnp.bfloat16).astype(jnp.float32)
    ref_lin = jnp.einsum("bi,qio->bqo", x_q, w_q) + b[None, :, :]
    assert out_lin.shape == (B, 4, Out)
    assert jnp.allclose(out_lin, ref_lin, atol=2e-3, rtol=2e-3)

    # ----- QuaternionEncoder(out_dim=32, input_dims=[5,7,11], combine='sum') -----
    input_dims = [5, 7, 11]
    F, V, D = len(input_dims), max(input_dims), Out
    k_idx, k_tab = jax.random.split(k_rest, 2)
    idx_keys = jax.random.split(k_idx, F)
    x_int = jnp.stack(
        [jax.random.randint(idx_keys[f], (B,), 0, input_dims[f]) for f in range(F)],
        axis=1,
    ).astype(jnp.int32)                               # (B, F)
    gain = math.sqrt(2.0)                             # xavier_uniform with gain sqrt(2)
    tbound = gain * math.sqrt(6.0 / (V + D))
    tables = jax.random.uniform(k_tab, (4, F, V, D), jnp.float32, -tbound, tbound)
    # zero the padded vocab rows (each feature f only has input_dims[f] valid rows)
    vocab_mask = (jnp.arange(V)[None, :] < jnp.asarray(input_dims)[:, None]).astype(jnp.float32)
    tables = tables * vocab_mask[None, :, :, None]

    emb_params = init_quaternion_integer_params(tables)          # fused once at init
    out_emb = quaternion_integer_fwd(emb_params, x_int, batch_tile=128)
    jax.block_until_ready(out_emb)

    tab_q = tables.astype(jnp.bfloat16).astype(jnp.float32)
    onehot_ref = jax.nn.one_hot(x_int, V, dtype=jnp.float32)      # (B, F, V)
    ref_emb = jnp.einsum("bfv,qfvd->bqd", onehot_ref, tab_q)
    assert out_emb.shape == (B, 4, D)
    assert jnp.allclose(out_emb, ref_emb, atol=2e-3, rtol=2e-3)

    print("KERNEL_OK")
</pallas_src>

<mosaic_0001>
module attributes {stable_mosaic.version = 11 : i64} {
  func.func @_qlinear_fused_kernel(%arg0: i32, %arg1: memref<128x32xf32, #tpu.memory_space<vmem>>, %arg2: memref<32x128xbf16, #tpu.memory_space<vmem>>, %arg3: memref<1x128xf32, #tpu.memory_space<vmem>>, %arg4: memref<128x128xf32, #tpu.memory_space<vmem>>) attributes {dimension_semantics = [#tpu.dimension_semantics<parallel>], iteration_bounds = array<i64: 2>, scalar_prefetch = 0 : i64, scratch_operands = 0 : i64, tpu.core_type = #tpu.core_type<tc>, window_params = [{transform_indices = @transform_0, window_bounds = array<i64: 128, 32>}, {pipeline_mode = #tpu.pipeline_mode<synchronous>, transform_indices = @transform_1, window_bounds = array<i64: 32, 128>}, {pipeline_mode = #tpu.pipeline_mode<synchronous>, transform_indices = @transform_2, window_bounds = array<i64: 1, 128>}, {transform_indices = @transform_3, window_bounds = array<i64: 128, 128>}]} {
    %c0 = arith.constant 0 : index
    %c0_0 = arith.constant 0 : index
    %0 = vector.load %arg1[%c0, %c0_0] : memref<128x32xf32, #tpu.memory_space<vmem>>, vector<128x32xf32>
    %1 = arith.truncf %0 : vector<128x32xf32> to vector<128x32xbf16>
    %c0_1 = arith.constant 0 : index
    %c0_2 = arith.constant 0 : index
    %2 = vector.load %arg2[%c0_1, %c0_2] : memref<32x128xbf16, #tpu.memory_space<vmem>>, vector<32x128xbf16>
    %cst = arith.constant dense<0.000000e+00> : vector<128x128xf32>
    %3 = tpu.matmul %1, %2, %cst {dimension_numbers = #tpu.dot_dimension_numbers<[1], [0], [0], [1], [0, 0, 1, 1], [], []>} : vector<128x32xbf16>, vector<32x128xbf16>, vector<128x128xf32> -> vector<128x128xf32>
    %c0_3 = arith.constant 0 : index
    %c0_4 = arith.constant 0 : index
    %4 = vector.load %arg3[%c0_3, %c0_4] : memref<1x128xf32, #tpu.memory_space<vmem>>, vector<1x128xf32>
    %5 = vector.broadcast %4 : vector<1x128xf32> to vector<128x128xf32>
    %6 = arith.addf %3, %5 : vector<128x128xf32>
    %c0_5 = arith.constant 0 : index
    %c0_6 = arith.constant 0 : index
    %7 = vector.load %arg4[%c0_5, %c0_6] : memref<128x128xf32, #tpu.memory_space<vmem>>, vector<128x128xf32>
    tpu.vector_store %arg4[%c0_5, %c0_6], %6 {strides = array<i32>} : memref<128x128xf32, #tpu.memory_space<vmem>>, vector<128x128xf32>,
    return
  }
  func.func @transform_0(%arg0: i32) -> (i32, i32) {
    %c0_i32 = arith.constant 0 : i32
    %c0_i32_0 = arith.constant 0 : i32
    return %arg0, %c0_i32 : i32, i32
  }
  func.func @transform_1(%arg0: i32) -> (i32, i32) {
    %c0_i32 = arith.constant 0 : i32
    %c0_i32_0 = arith.constant 0 : i32
    %c0_i32_1 = arith.constant 0 : i32
    return %c0_i32, %c0_i32_0 : i32, i32
  }
  func.func @transform_2(%arg0: i32) -> (i32, i32) {
    %c0_i32 = arith.constant 0 : i32
    %c0_i32_0 = arith.constant 0 : i32
    %c0_i32_1 = arith.constant 0 : i32
    return %c0_i32, %c0_i32_0 : i32, i32
  }
  func.func @transform_3(%arg0: i32) -> (i32, i32) {
    %c0_i32 = arith.constant 0 : i32
    %c0_i32_0 = arith.constant 0 : i32
    return %arg0, %c0_i32 : i32, i32
  }
}

</mosaic_0001>

<llo_original>
// kernel: tpu_custom_call.1
$region0: #{tpu_custom_call.1}
  #allocation0 [shape = 'u32[]', space=smem, size = 0x4, offset = 0x4, fixed_abs, tag = 'smem constant byte address 0x4 - core index']
  #allocation1 [shape = 'u32[144,128]{1,0:T(1,128)}', space=vmem, size = 0x12000, scoped, tag = 'internal scratch']
  %s0 = inlined_call_operand.vmem [shape: f32[256,32], index: 0, kind: input, shape index: {}]
  %s1 = inlined_call_operand.vmem [shape: bf16[32,128], index: 1, kind: input, shape index: {}]
  %s2 = inlined_call_operand.vmem [shape: f32[1,128], index: 2, kind: input, shape index: {}]
  %s3 = inlined_call_operand.hbm [shape: f32[256,128], index: 3, kind: output, shape index: {}]
  %s4 = sld [smem:[#allocation0]]
  $region45: #{tpu_custom_call.1} parent=0
    _
  %s6 = ssub.s32 1, %s4
  %s7 = scalar_select 0, %s6, %s4
  $region1: #{tpu_custom_call.1} parent=0
    #allocation2 [shape = 'u8[131072]{0}', space=vmem, size = 0x20000, scoped, tag = 'output window, operand 0']
    #allocation3 [shape = 's32[2]{0}', space=sflag, size = 0x8, scoped, tag = 'scoped memory for tpu_custom_call.1']
    %8 = vsyncpa [#allocation3], 0
    %s9 = scalar_lea.sflag [#allocation3], 1
    %10 = vsyncpa %s9, 0
    loop: start=0, step=1, limit=4
    $region2: #{tpu_custom_call.1} parent=1 // loop_pre_header
      _
    $region3: #{tpu_custom_call.1} parent=1 // loop_header
      %s12 = sphi 0, %s16
      %p13 = scmp.ge.s32.totalorder %s12, 4
      %s22 = sphi 0, %s24
      %s25 = sphi 0, %s22
      %s26 = sphi 0, %s25
      %s42 = sphi 0, %s26
      %s46 = sphi 0, %s46
      %s48 = sphi 0, %s46
      %s49 = sphi 0, %s48
      %s63 = sphi 0, %s49
      %s67 = sphi 0, %s67
      %s69 = sphi 0, %s67
      %s70 = sphi 0, %s69
      %s84 = sphi 0, %s70
      %s90 = sphi 0, %s92
      %s93 = sphi 0, %s90
      %s94 = sphi 0, %s93
      %s110 = sphi 0, %s94
    $region4: #{tpu_custom_call.1} parent=1 // loop_header_branch
      %15 = sbr.rel (%p13) target = $region8
    $region5: #{tpu_custom_call.1} parent=1 // loop_body
      %s17 = ssub.s32 %s12, 1
      %s18 = ssub.s32 %s12, 2
      %s19 = sadd.s32 %s12, 1
      %s20 = ssub.s32 %s12, %s19
      %p21 = scmp.eq.s32.totalorder %s20, 0
      %s23 = sadd.s32 %s22, 1
      %s24 = scalar_select %p21, %s22, %s23
      %p27 = pneg %p21
      %p28 = scmp.eq.s32.totalorder %s12, 1
      %p29 = por %p27, %p28
      %p30 = scmp.ne.s32.totalorder %s22, %s25
      %p31 = scmp.eq.s32.totalorder %s12, 0
      %p32 = por %p30, %p31
      %p33 = scmp.ne.s32.totalorder %s22, %s25
      %p34 = scmp.eq.s32.totalorder %s17, 1
      %p35 = por %p33, %p34
      %p36 = scmp.ne.s32.totalorder %s25, %s26
      %p37 = scmp.eq.s32.totalorder %s17, 0
      %p38 = por %p36, %p37
      %p39 = scmp.ne.s32.totalorder %s25, %s26
      %p40 = scmp.eq.s32.totalorder %s18, 1
      %p41 = por %p39, %p40
      %p43 = scmp.ne.s32.totalorder %s26, %s42
      %p44 = scmp.eq.s32.totalorder %s18, 0
      %p45 = por %p43, %p44
      %s47 = sadd.s32 %s46, 1
      %p50 = scmp.eq.s32.totalorder %s12, 1
      %p51 = scmp.ne.s32.totalorder %s46, %s48
      %p52 = scmp.eq.s32.totalorder %s12, 0
      %p53 = por %p51, %p52
      %p54 = scmp.ne.s32.totalorder %s46, %s48
      %p55 = scmp.eq.s32.totalorder %s17, 1
      %p56 = por %p54, %p55
      %p57 = scmp.ne.s32.totalorder %s48, %s49
      %p58 = scmp.eq.s32.totalorder %s17, 0
      %p59 = por %p57, %p58
      %p60 = scmp.ne.s32.totalorder %s48, %s49
      %p61 = scmp.eq.s32.totalorder %s18, 1
      %p62 = por %p60, %p61
      %p64 = scmp.ne.s32.totalorder %s49, %s63
      %p65 = scmp.eq.s32.totalorder %s18, 0
      %p66 = por %p64, %p65
      %s68 = sadd.s32 %s67, 1
      %p71 = scmp.eq.s32.totalorder %s12, 1
      %p72 = scmp.ne.s32.totalorder %s67, %s69
      %p73 = scmp.eq.s32.totalorder %s12, 0
      %p74 = por %p72, %p73
      %p75 = scmp.ne.s32.totalorder %s67, %s69
      %p76 = scmp.eq.s32.totalorder %s17, 1
      %p77 = por %p75, %p76
      %p78 = scmp.ne.s32.totalorder %s69, %s70
      %p79 = scmp.eq.s32.totalorder %s17, 0
      %p80 = por %p78, %p79
      %p81 = scmp.ne.s32.totalorder %s69, %s70
      %p82 = scmp.eq.s32.totalorder %s18, 1
      %p83 = por %p81, %p82
      %p85 = scmp.ne.s32.totalorder %s70, %s84
      %p86 = scmp.eq.s32.totalorder %s18, 0
      %p87 = por %p85, %p86
      %s88 = ssub.s32 %s12, %s19
      %p89 = scmp.eq.s32.totalorder %s88, 0
      %s91 = sadd.s32 %s90, 1
      %s92 = scalar_select %p89, %s90, %s91
      %p95 = pneg %p89
      %p96 = scmp.eq.s32.totalorder %s12, 1
      %p97 = por %p95, %p96
      %p98 = scmp.ne.s32.totalorder %s90, %s93
      %p99 = scmp.eq.s32.totalorder %s12, 0
      %p100 = por %p98, %p99
      %p101 = scmp.ne.s32.totalorder %s90, %s93
      %p102 = scmp.eq.s32.totalorder %s17, 1
      %p103 = por %p101, %p102
      %p104 = scmp.ne.s32.totalorder %s93, %s94
      %p105 = scmp.eq.s32.totalorder %s17, 0
      %p106 = por %p104, %p105
      %p107 = scmp.ne.s32.totalorder %s93, %s94
      %p108 = scmp.eq.s32.totalorder %s18, 1
      %p109 = por %p107, %p108
      %p111 = scmp.ne.s32.totalorder %s94, %s110
      %p112 = scmp.eq.s32.totalorder %s18, 0
      %p113 = por %p111, %p112
      %p114 = scmp.le.s32.totalorder 1, %s12
      %p115 = scmp.lt.s32.totalorder %s12, 3
      %p116 = pnand %p114, %p115
      %p117 = pneg %p116
      // Predicated region
      $region9: #{tpu_custom_call.1} parent=5 // pred_check
        _
      $region10: #{tpu_custom_call.1} parent=5 // pred_check_branch
        %119 = sbr.rel (%p116) target = $region12
      $region11: #{tpu_custom_call.1} parent=5 // pred_region
        %s120 = ssub.s32 %s12, 1
        // Predicated region
        $region13: #{tpu_custom_call.1} parent=11 // pred_check
          %p121 = pneg %p59
        $region14: #{tpu_custom_call.1} parent=11 // pred_check_branch
          %123 = sbr.rel (%p121) target = $region16
        $region15: #{tpu_custom_call.1} parent=11 // pred_region
          _
        $region16: #{tpu_custom_call.1} parent=11 // pred_fallthru
          _
        // Predicated region
        $region17: #{tpu_custom_call.1} parent=11 // pred_check
          %p124 = pneg %p80
        $region18: #{tpu_custom_call.1} parent=11 // pred_check_branch
          %126 = sbr.rel (%p124) target = $region20
        $region19: #{tpu_custom_call.1} parent=11 // pred_region
          _
        $region20: #{tpu_custom_call.1} parent=11 // pred_fallthru
          _
      $region12: #{tpu_custom_call.1} parent=5 // pred_fallthru
        _
      %p127 = scmp.lt.s32.totalorder %s12, 2
      // Predicated region
      $region21: #{tpu_custom_call.1} parent=5 // pred_check
        %p128 = pneg %p127
      $region22: #{tpu_custom_call.1} parent=5 // pred_check_branch
        %130 = sbr.rel (%p128) target = $region24
      $region23: #{tpu_custom_call.1} parent=5 // pred_region
        // Predicated region
        $region25: #{tpu_custom_call.1} parent=23 // pred_check
          %p131 = pneg %p32
        $region26: #{tpu_custom_call.1} parent=23 // pred_check_branch
          %133 = sbr.rel (%p131) target = $region28
        $region27: #{tpu_custom_call.1} parent=23 // pred_region
          %s134 = smul.u32 16, %s12
          %p135 = scmp.lt.s32.totalorder %s134, 31
          %s136 = scalar_select %p135, %s134, 31
          %s137 = smul.addr %s136, 8
          %s138 = scalar_lea.vmem %s0, %s137
          %s139 = smul.u32 16, %s12
        $region28: #{tpu_custom_call.1} parent=23 // pred_fallthru
          _
      $region24: #{tpu_custom_call.1} parent=5 // pred_fallthru
        _
      %p140 = scmp.le.s32.totalorder 1, %s12
      %p141 = scmp.lt.s32.totalorder %s12, 3
      %p142 = pnand %p140, %p141
      %p143 = pneg %p142
      // Predicated region
      $region29: #{tpu_custom_call.1} parent=5 // pred_check
        _
      $region30: #{tpu_custom_call.1} parent=5 // pred_check_branch
        %145 = sbr.rel (%p142) target = $region32
      $region31: #{tpu_custom_call.1} parent=5 // pred_region
        %s146 = ssub.s32 %s12, 1
        %s147 = smul.u32 16, %s17
        %p148 = scmp.lt.s32.totalorder %s147, 31
        %s149 = scalar_select %p148, %s147, 31
        %s150 = smul.addr %s149, 8
        %s151 = scalar_lea.vmem %s0, %s150
        %p152 = pneg %p38
        %p153 = pneg %p35
        %p154 = pneg %p59
        %p155 = pneg %p56
        %p156 = pneg %p80
        %p157 = pneg %p77
        %p158 = pneg %p106
        %p159 = pneg %p103
        %s160 = sand.u32 %s93, 1
        %s161 = scalar_lea.sflag [#allocation3], %s160
        %s162 = sand.u32 %s93, 1
        %s163 = smul.addr %s162, 128
        %s164 = scalar_lea.vmem [#allocation2], %s163
        %s165 = smul.u32 16, %s17
        %p166 = scmp.lt.s32.totalorder %s165, 31
        %s167 = scalar_select %p166, %s165, 31
        %s168 = smul.addr %s167, 8
        %s169 = scalar_lea.vmem %s0, %s168
        %s170 = smul.u32 16, %s17
        %s171 = smul.u32 16, %s17
        %v173 = vld [vmem:[%s169] sm:$0xff]
        %v174 = vld [vmem:[%s169 + $0x8] sm:$0xff]
        %v175 = vld [vmem:[%s169 + $0x10] sm:$0xff]
        %v176 = vld [vmem:[%s169 + $0x18] sm:$0xff]
        %v177 = vld [vmem:[%s169 + $0x20] sm:$0xff]
        %v178 = vld [vmem:[%s169 + $0x28] sm:$0xff]
        %v179 = vld [vmem:[%s169 + $0x30] sm:$0xff]
        %v180 = vld [vmem:[%s169 + $0x38] sm:$0xff]
        %v181 = vld [vmem:[%s169 + $0x40] sm:$0xff]
        %v182 = vld [vmem:[%s169 + $0x48] sm:$0xff]
        %v183 = vld [vmem:[%s169 + $0x50] sm:$0xff]
        %v184 = vld [vmem:[%s169 + $0x58] sm:$0xff]
        %v185 = vld [vmem:[%s169 + $0x60] sm:$0xff]
        %v186 = vld [vmem:[%s169 + $0x68] sm:$0xff]
        %v187 = vld [vmem:[%s169 + $0x70] sm:$0xff]
        %v188 = vld [vmem:[%s169 + $0x78] sm:$0xff]
        %v189 = vpack.c.bf16 %v174, %v173
        %v190 = vpack.c.bf16 %v176, %v175
        %v191 = vpack.c.bf16 %v178, %v177
        %v192 = vpack.c.bf16 %v180, %v179
        %v193 = vpack.c.bf16 %v182, %v181
        %v194 = vpack.c.bf16 %v184, %v183
        %v195 = vpack.c.bf16 %v186, %v185
        %v196 = vpack.c.bf16 %v188, %v187
        %v197 = vld [vmem:[%s1] sm:$0xf]
        %v198 = vld [vmem:[%s1 + $0x4] sm:$0xf]
        %v199 = vld [vmem:[%s1 + $0x8] sm:$0xf]
        %v200 = vld [vmem:[%s1 + $0xc] sm:$0xf]
        %v201 = vld [vmem:[%s2] sm:$0x1]
        %v203 = vlaneseq
        %v204 = vshrl.u32 %v203, 7
        %v205 = vsub.s32 0, %v204
        %v206 = vrot.slane %v201, %v205
        %v212 = vunpack.c.l.b16 %v197
        %v213 = vunpack.c.l.b16 %v198
        %v214 = vunpack.c.l.b16 %v199
        %v215 = vunpack.c.l.b16 %v200
        %v216 = vpack.c.b16 %v213, %v212
        %v217 = vpack.c.b16 %v215, %v214
        %vm220 = vcmask 261120
        %v222 = vsel %vm220, %v189, 0
        %v225 = vsel %vm220, %v190, 0
        %v228 = vsel %vm220, %v191, 0
        %v231 = vsel %vm220, %v192, 0
        %v234 = vsel %vm220, %v193, 0
        %v237 = vsel %vm220, %v194, 0
        %v240 = vsel %vm220, %v195, 0
        %v243 = vsel %vm220, %v196, 0
        %245 = vmatprep.subr.bf16.mxu0 0
        %246 = vmatpush1.bf16.msra.mxu0 %v216
        %247 = vmatprep.subr.bf16.mxu0 0
        %248 = vmatpush1.bf16.msra.mxu0 %v217
        %249 = vmatprep.subr.bf16.mxu0 0
        %250 = vmatpush1.bf16.msra.mxu0 0
        %251 = vmatprep.subr.bf16.mxu0 0
        %252 = vmatpush1.bf16.msra.mxu0 0
        %253 = vmatprep.subr.bf16.mxu0 0
        %254 = vmatpush1.bf16.msra.mxu0 0
        %255 = vmatprep.subr.bf16.mxu0 0
        %256 = vmatpush1.bf16.msra.mxu0 0
        %257 = vmatprep.subr.bf16.mxu0 0
        %258 = vmatpush1.bf16.msra.mxu0 0
        %259 = vmatprep.subr.bf16.mxu0 0
        %260 = vmatpush1.bf16.msra.mxu0 0
        %261 = vmatprep.subr.bf16.mxu0 0
        %262 = vmatpush1.bf16.msra.mxu0 0
        %263 = vmatprep.subr.bf16.mxu0 0
        %264 = vmatpush1.bf16.msra.mxu0 0
        %265 = vmatprep.subr.bf16.mxu0 0
        %266 = vmatpush1.bf16.msra.mxu0 0
        %267 = vmatprep.subr.bf16.mxu0 0
        %268 = vmatpush1.bf16.msra.mxu0 0
        %269 = vmatprep.subr.bf16.mxu0 0
        %270 = vmatpush1.bf16.msra.mxu0 0
        %271 = vmatprep.subr.bf16.mxu0 0
        %272 = vmatpush1.bf16.msra.mxu0 0
        %273 = vmatprep.subr.bf16.mxu0 0
        %274 = vmatpush1.bf16.msra.mxu0 0
        %275 = vmatprep.subr.bf16.mxu0 0
        %276 = vmatpush1.bf16.msra.mxu0 0
        %277 = vmatprep.mubr.bf16.mxu0 0
        %278 = vmatmul.mubr.bf16.gmra.mrb[0].mxu0 %v222
        %v279 = vpop.f32.mrb[0].mxu0
        %v280 = vadd.f32 %v206, %v279
        %v281 = vpop.f32.mrb[0].mxu0
        %v282 = vpop.f32.mrb[0].mxu0
        %v283 = vadd.f32 %v206, %v282
        %v284 = vpop.f32.mrb[0].mxu0
        %285 = vmatprep.mubr.bf16.mxu0 0
        %286 = vmatmul.mubr.bf16.gmra.mrb[0].mxu0 %v225
        %v287 = vpop.f32.mrb[0].mxu0
        %v288 = vadd.f32 %v206, %v287
        %v289 = vpop.f32.mrb[0].mxu0
        %v290 = vpop.f32.mrb[0].mxu0
        %v291 = vadd.f32 %v206, %v290
        %v292 = vpop.f32.mrb[0].mxu0
        %293 = vmatprep.mubr.bf16.mxu0 0
        %294 = vmatmul.mubr.bf16.gmra.mrb[0].mxu0 %v228
        %v295 = vpop.f32.mrb[0].mxu0
        %v296 = vadd.f32 %v206, %v295
        %v297 = vpop.f32.mrb[0].mxu0
        %v298 = vpop.f32.mrb[0].mxu0
        %v299 = vadd.f32 %v206, %v298
        %v300 = vpop.f32.mrb[0].mxu0
        %301 = vmatprep.mubr.bf16.mxu0 0
        %302 = vmatmul.mubr.bf16.gmra.mrb[0].mxu0 %v231
        %v303 = vpop.f32.mrb[0].mxu0
        %v304 = vadd.f32 %v206, %v303
        %v305 = vpop.f32.mrb[0].mxu0
        %v306 = vpop.f32.mrb[0].mxu0
        %v307 = vadd.f32 %v206, %v306
        %v308 = vpop.f32.mrb[0].mxu0
        %309 = vmatprep.mubr.bf16.mxu0 0
        %310 = vmatmul.mubr.bf16.gmra.mrb[0].mxu0 %v234
        %v311 = vpop.f32.mrb[0].mxu0
        %v312 = vadd.f32 %v206, %v311
        %v313 = vpop.f32.mrb[0].mxu0
        %v314 = vpop.f32.mrb[0].mxu0
        %v315 = vadd.f32 %v206, %v314
        %v316 = vpop.f32.mrb[0].mxu0
        %317 = vmatprep.mubr.bf16.mxu0 0
        %318 = vmatmul.mubr.bf16.gmra.mrb[0].mxu0 %v237
        %v319 = vpop.f32.mrb[0].mxu0
        %v320 = vadd.f32 %v206, %v319
        %v321 = vpop.f32.mrb[0].mxu0
        %v322 = vpop.f32.mrb[0].mxu0
        %v323 = vadd.f32 %v206, %v322
        %v324 = vpop.f32.mrb[0].mxu0
        %325 = vmatprep.mubr.bf16.mxu0 0
        %326 = vmatmul.mubr.bf16.gmra.mrb[0].mxu0 %v240
        %v327 = vpop.f32.mrb[0].mxu0
        %v328 = vadd.f32 %v206, %v327
        %v329 = vpop.f32.mrb[0].mxu0
        %v330 = vpop.f32.mrb[0].mxu0
        %v331 = vadd.f32 %v206, %v330
        %v332 = vpop.f32.mrb[0].mxu0
        %333 = vmatprep.mubr.bf16.mxu0 0
        %334 = vmatmul.mubr.bf16.gmra.mrb[0].mxu0 %v243
        %v335 = vpop.f32.mrb[0].mxu0
        %v336 = vadd.f32 %v206, %v335
        %v337 = vpop.f32.mrb[0].mxu0
        %v338 = vpop.f32.mrb[0].mxu0
        %v339 = vadd.f32 %v206, %v338
        %v340 = vpop.f32.mrb[0].mxu0
        %341 = vdwg.mxu0
        %342 = vst [vmem:[%s164] sm:$0xff] %v280
        %343 = vst [vmem:[%s164 + $0x8] sm:$0xff] %v283
        %344 = vst [vmem:[%s164 + $0x10] sm:$0xff] %v288
        %345 = vst [vmem:[%s164 + $0x18] sm:$0xff] %v291
        %346 = vst [vmem:[%s164 + $0x20] sm:$0xff] %v296
        %347 = vst [vmem:[%s164 + $0x28] sm:$0xff] %v299
        %348 = vst [vmem:[%s164 + $0x30] sm:$0xff] %v304
        %349 = vst [vmem:[%s164 + $0x38] sm:$0xff] %v307
        %350 = vst [vmem:[%s164 + $0x40] sm:$0xff] %v312
        %351 = vst [vmem:[%s164 + $0x48] sm:$0xff] %v315
        %352 = vst [vmem:[%s164 + $0x50] sm:$0xff] %v320
        %353 = vst [vmem:[%s164 + $0x58] sm:$0xff] %v323
        %354 = vst [vmem:[%s164 + $0x60] sm:$0xff] %v328
        %355 = vst [vmem:[%s164 + $0x68] sm:$0xff] %v331
        %356 = vst [vmem:[%s164 + $0x70] sm:$0xff] %v336
        %357 = vst [vmem:[%s164 + $0x78] sm:$0xff] %v339
        %s358 = sand.u32 %s93, 1
        %s359 = scalar_lea.sflag [#allocation3], %s358
        %s360 = sand.u32 %s93, 1
        %s361 = smul.addr %s360, 128
        %s362 = scalar_lea.vmem [#allocation2], %s361
        // Predicated region
        $region33: #{tpu_custom_call.1} parent=31 // pred_check
          %p363 = pneg %p103
        $region34: #{tpu_custom_call.1} parent=31 // pred_check_branch
          %365 = sbr.rel (%p363) target = $region36
        $region35: #{tpu_custom_call.1} parent=31 // pred_region
          %s366 = smul.u32 16, %s17
          %s368 = ssub.s32 2048, 2048
          %369 = vsyncadd %s359, %s368
          %s370 = smul.addr %s366, 128
          %s371 = scalar_lea.hbm %s3, %s370
          %s372 = sshll.u32 %s362, 4
          %s373 = int_to_ptr.vmem [resolvable:$true] %s372
          %378 = dma.vmem_to_hbm [thread:$0]  %s373, 2048, %s371, %s359, 128, 128, 8
        $region36: #{tpu_custom_call.1} parent=31 // pred_fallthru
          _
      $region32: #{tpu_custom_call.1} parent=5 // pred_fallthru
        _
      %p379 = scmp.le.s32.totalorder 2, %s12
      // Predicated region
      $region37: #{tpu_custom_call.1} parent=5 // pred_check
        %p380 = pneg %p379
      $region38: #{tpu_custom_call.1} parent=5 // pred_check_branch
        %382 = sbr.rel (%p380) target = $region40
      $region39: #{tpu_custom_call.1} parent=5 // pred_region
        %s383 = ssub.s32 %s12, 2
        // Predicated region
        $region41: #{tpu_custom_call.1} parent=39 // pred_check
          %p384 = pneg %p109
        $region42: #{tpu_custom_call.1} parent=39 // pred_check_branch
          %386 = sbr.rel (%p384) target = $region44
        $region43: #{tpu_custom_call.1} parent=39 // pred_region
          %s387 = sand.u32 %s94, 1
          %s388 = scalar_lea.sflag [#allocation3], %s387
          %s389 = sand.u32 %s94, 1
          %s390 = smul.addr %s389, 128
          %s391 = scalar_lea.vmem [#allocation2], %s390
          %392 = dma.done %s388, 2048
        $region44: #{tpu_custom_call.1} parent=39 // pred_fallthru
          _
      $region40: #{tpu_custom_call.1} parent=5 // pred_fallthru
        _
    $region6: #{tpu_custom_call.1} parent=1 // loop_footer
      %s16 = sadd.s32 1, %s12
    $region7: #{tpu_custom_call.1} parent=1 // loop_footer_branch
      %11 = sbr.rel target = $region3
    $region8: #{tpu_custom_call.1} parent=1 // loop_exit
      _
    %393 = vsyncpa [#allocation3], 1
    %s394 = scalar_lea.sflag [#allocation3], 1
    %395 = vsyncpa %s394, 1

</llo_original>
